<compile_context>
chip_gen: v7x
topology: tpu7x:2x2x1
jax: 0.10.0
libtpu: 0.0.40
codegen_flags: <defaults>
</compile_context>

<pallas_src>
import jax
import jax.numpy as jnp
from jax.experimental import pallas as pl
from jax.experimental.pallas import tpu as pltpu

# Padded tile sizes (f32 vreg is 8 sublanes x 128 lanes).
PAD_B = 8     # rows per activation tile (sublane-full)
PAD_F = 128   # padded feature dim (lane-dense, single MXU pass)

# Logical layer sizes of NestMLP.
D_IN, D_H1, D_H2, D_OUT = 20, 64, 32, 16


def nest_mlp_kernel(x_ref, w_ref, o_ref):
    """Fused 3-layer MLP on one (PAD_B, PAD_F) activation tile.

    x_ref: (PAD_B, PAD_F) f32 padded activations; column D_IN of each real row
           holds a constant 1.0 (the folded-bias carry column).
    w_ref: (3, PAD_F, PAD_F) bf16 packed augmented weights.  Slab l contains
           [W_l; b_l] in its top-left corner plus a 1.0 that propagates the
           carry column to the next layer's expected position.
    o_ref: (PAD_B, PAD_F) f32 lane-dense output slab (unmasked stores).
    """
    h = x_ref[...]  # f32
    # Layer 1: Linear(20 -> 64) + folded bias + ReLU (bf16 MXU, f32 accum/VPU).
    h = jnp.maximum(
        jnp.dot(h.astype(jnp.bfloat16), w_ref[0],
                preferred_element_type=jnp.float32), 0.0)
    # Layer 2: Linear(64 -> 32) + folded bias + ReLU.
    h = jnp.maximum(
        jnp.dot(h.astype(jnp.bfloat16), w_ref[1],
                preferred_element_type=jnp.float32), 0.0)
    # Layer 3: Linear(32 -> 16) + folded bias, no activation.
    o_ref[...] = jnp.dot(h.astype(jnp.bfloat16), w_ref[2],
                         preferred_element_type=jnp.float32)


def _pack_augmented(w, b, dim=PAD_F):
    """Pack [W; b] into a zero-padded (dim, dim) bf16 slab with a carry bit.

    W: (d_in, d_out) so that y = x @ W + b matches PyTorch's x @ W.T.
    The 1.0 at [d_in, d_out] propagates the ones column to position d_out of
    this layer's output, where the next layer's bias row expects it.
    """
    d_in, d_out = w.shape
    slab = jnp.zeros((dim, dim), jnp.float32)
    slab = slab.at[:d_in, :d_out].set(w)
    slab = slab.at[d_in, :d_out].set(jnp.reshape(b, (-1,)))
    slab = slab.at[d_in, d_out].set(1.0)
    return slab.astype(jnp.bfloat16)


def pack_params(params):
    """One-time preprocessing: (w1,b1,w2,b2,w3,b3) -> (3, PAD_F, PAD_F) bf16."""
    w1, b1, w2, b2, w3, b3 = params
    return jnp.stack(
        [_pack_augmented(w1, b1), _pack_augmented(w2, b2), _pack_augmented(w3, b3)]
    )


@jax.jit
def nest_mlp(x, w_packed):
    B = x.shape[0]
    num_tiles = pl.cdiv(B, PAD_B)
    rows = num_tiles * PAD_B

    # Fusible padding: concat the carry ones column, then pad to the tile grid.
    ones_col = jnp.ones((B, 1), jnp.float32)
    x_aug = jnp.concatenate([x.astype(jnp.float32), ones_col], axis=1)
    x_padded = jnp.pad(x_aug, ((0, rows - B), (0, PAD_F - (D_IN + 1))))

    # Advisory cost: 3 bf16 (8,128)@(128,128) matmuls per tile; f32 act I/O +
    # one bf16 weight slab.
    cost = pl.CostEstimate(
        flops=2 * rows * PAD_F * PAD_F * 3,
        transcendentals=0,
        bytes_accessed=4 * rows * PAD_F * 2 + 2 * 3 * PAD_F * PAD_F,
    )

    out_padded = pl.pallas_call(
        nest_mlp_kernel,
        out_shape=jax.ShapeDtypeStruct((rows, PAD_F), jnp.float32),
        grid=(num_tiles,),
        in_specs=[
            # Activation tiles stream through (double-buffered by Pallas).
            pl.BlockSpec((PAD_B, PAD_F), lambda i: (i, 0)),
            # Weight slab: constant index_map -> DMA'd once, stays VMEM-resident.
            pl.BlockSpec((3, PAD_F, PAD_F), lambda i: (0, 0, 0)),
        ],
        out_specs=pl.BlockSpec((PAD_B, PAD_F), lambda i: (i, 0)),
        compiler_params=pltpu.CompilerParams(
            dimension_semantics=("parallel",),      # v7x: shard tiles over 2 TCs
            allow_input_fusion=[True, False],       # fold the pad into the call
        ),
        cost_estimate=cost,
    )(x_padded, w_packed)

    # Slice the real rows / features outside the kernel (keeps the kernel's
    # stores lane-dense and unmasked).
    return out_padded[:B, :D_OUT]


def init_linear(key, fan_in, fan_out):
    """PyTorch-style default init: U(-1/sqrt(fan_in), 1/sqrt(fan_in))."""
    kw, kb = jax.random.split(key)
    bound = 1.0 / (fan_in ** 0.5)
    w = jax.random.uniform(kw, (fan_in, fan_out), jnp.float32, -bound, bound)
    b = jax.random.uniform(kb, (fan_out,), jnp.float32, -bound, bound)
    return w, b


def reference_forward(x, params):
    """Reference that mirrors the kernel's numerics (bf16 weights/dot inputs,
    f32 accumulation and activations)."""
    w1, b1, w2, b2, w3, b3 = params
    bf = lambda a: a.astype(jnp.bfloat16)
    f32 = jnp.float32
    h = jnp.maximum(
        jnp.dot(bf(x), bf(w1), preferred_element_type=f32) + bf(b1).astype(f32), 0.0)
    h = jnp.maximum(
        jnp.dot(bf(h), bf(w2), preferred_element_type=f32) + bf(b2).astype(f32), 0.0)
    return jnp.dot(bf(h), bf(w3), preferred_element_type=f32) + bf(b3).astype(f32)


if __name__ == "__main__":
    key = jax.random.PRNGKey(0)
    kx, k1, k2, k3 = jax.random.split(key, 4)

    # Input consistent with the module: X = torch.rand(2, 20)
    x = jax.random.uniform(kx, (2, D_IN), jnp.float32)

    w1, b1 = init_linear(k1, D_IN, D_H1)
    w2, b2 = init_linear(k2, D_H1, D_H2)
    w3, b3 = init_linear(k3, D_H2, D_OUT)
    params = (w1, b1, w2, b2, w3, b3)

    # One-time parameter packing (weights + biases -> single padded bf16 slab).
    w_packed = pack_params(params)

    out = nest_mlp(x, w_packed)
    jax.block_until_ready(out)

    ref = reference_forward(x, params)
    assert out.shape == (2, D_OUT), out.shape
    assert jnp.allclose(out, ref, atol=1e-3, rtol=1e-3), "mismatch vs JAX reference"

    print("KERNEL_OK")
</pallas_src>

<mosaic_0001>
module attributes {stable_mosaic.version = 11 : i64} {
  func.func @nest_mlp_kernel(%arg0: i32, %arg1: memref<8x128xf32, #tpu.memory_space<vmem>>, %arg2: memref<3x128x128xbf16, #tpu.memory_space<vmem>>, %arg3: memref<8x128xf32, #tpu.memory_space<vmem>>) attributes {dimension_semantics = [#tpu.dimension_semantics<parallel>], iteration_bounds = array<i64: 1>, scalar_prefetch = 0 : i64, scratch_operands = 0 : i64, tpu.core_type = #tpu.core_type<tc>, window_params = [{transform_indices = @transform_0, window_bounds = array<i64: 8, 128>}, {pipeline_mode = #tpu.pipeline_mode<synchronous>, transform_indices = @transform_1, window_bounds = array<i64: 3, 128, 128>}, {transform_indices = @transform_2, window_bounds = array<i64: 8, 128>}]} {
    %c0 = arith.constant 0 : index
    %c0_0 = arith.constant 0 : index
    %0 = vector.load %arg1[%c0, %c0_0] : memref<8x128xf32, #tpu.memory_space<vmem>>, vector<8x128xf32>
    %1 = arith.truncf %0 : vector<8x128xf32> to vector<8x128xbf16>
    %c0_1 = arith.constant 0 : index
    %c0_2 = arith.constant 0 : index
    %c0_3 = arith.constant 0 : index
    %2 = vector.load %arg2[%c0_1, %c0_2, %c0_3] : memref<3x128x128xbf16, #tpu.memory_space<vmem>>, vector<1x128x128xbf16>
    %3 = vector.shape_cast %2 : vector<1x128x128xbf16> to vector<128x128xbf16>
    %cst = arith.constant dense<0.000000e+00> : vector<8x128xf32>
    %4 = tpu.matmul %1, %3, %cst {dimension_numbers = #tpu.dot_dimension_numbers<[1], [0], [0], [1], [0, 0, 1, 1], [], []>} : vector<8x128xbf16>, vector<128x128xbf16>, vector<8x128xf32> -> vector<8x128xf32>
    %cst_4 = arith.constant 0.000000e+00 : f32
    %5 = vector.broadcast %cst_4 : f32 to vector<8x128xf32>
    %6 = arith.maximumf %4, %5 : vector<8x128xf32>
    %7 = arith.truncf %6 : vector<8x128xf32> to vector<8x128xbf16>
    %c1 = arith.constant 1 : index
    %c0_5 = arith.constant 0 : index
    %c0_6 = arith.constant 0 : index
    %8 = vector.load %arg2[%c1, %c0_5, %c0_6] : memref<3x128x128xbf16, #tpu.memory_space<vmem>>, vector<1x128x128xbf16>
    %9 = vector.shape_cast %8 : vector<1x128x128xbf16> to vector<128x128xbf16>
    %cst_7 = arith.constant dense<0.000000e+00> : vector<8x128xf32>
    %10 = tpu.matmul %7, %9, %cst_7 {dimension_numbers = #tpu.dot_dimension_numbers<[1], [0], [0], [1], [0, 0, 1, 1], [], []>} : vector<8x128xbf16>, vector<128x128xbf16>, vector<8x128xf32> -> vector<8x128xf32>
    %cst_8 = arith.constant 0.000000e+00 : f32
    %11 = vector.broadcast %cst_8 : f32 to vector<8x128xf32>
    %12 = arith.maximumf %10, %11 : vector<8x128xf32>
    %13 = arith.truncf %12 : vector<8x128xf32> to vector<8x128xbf16>
    %c2 = arith.constant 2 : index
    %c0_9 = arith.constant 0 : index
    %c0_10 = arith.constant 0 : index
    %14 = vector.load %arg2[%c2, %c0_9, %c0_10] : memref<3x128x128xbf16, #tpu.memory_space<vmem>>, vector<1x128x128xbf16>
    %15 = vector.shape_cast %14 : vector<1x128x128xbf16> to vector<128x128xbf16>
    %cst_11 = arith.constant dense<0.000000e+00> : vector<8x128xf32>
    %16 = tpu.matmul %13, %15, %cst_11 {dimension_numbers = #tpu.dot_dimension_numbers<[1], [0], [0], [1], [0, 0, 1, 1], [], []>} : vector<8x128xbf16>, vector<128x128xbf16>, vector<8x128xf32> -> vector<8x128xf32>
    %c0_12 = arith.constant 0 : index
    %c0_13 = arith.constant 0 : index
    %17 = vector.load %arg3[%c0_12, %c0_13] : memref<8x128xf32, #tpu.memory_space<vmem>>, vector<8x128xf32>
    tpu.vector_store %arg3[%c0_12, %c0_13], %16 {strides = array<i32>} : memref<8x128xf32, #tpu.memory_space<vmem>>, vector<8x128xf32>,
    return
  }
  func.func @transform_0(%arg0: i32) -> (i32, i32) {
    %c0_i32 = arith.constant 0 : i32
    %c0_i32_0 = arith.constant 0 : i32
    return %arg0, %c0_i32 : i32, i32
  }
  func.func @transform_1(%arg0: i32) -> (i32, i32, i32) {
    %c0_i32 = arith.constant 0 : i32
    %c0_i32_0 = arith.constant 0 : i32
    %c0_i32_1 = arith.constant 0 : i32
    %c0_i32_2 = arith.constant 0 : i32
    return %c0_i32, %c0_i32_0, %c0_i32_1 : i32, i32, i32
  }
  func.func @transform_2(%arg0: i32) -> (i32, i32) {
    %c0_i32 = arith.constant 0 : i32
    %c0_i32_0 = arith.constant 0 : i32
    return %arg0, %c0_i32 : i32, i32
  }
}

</mosaic_0001>

<llo_original>
// kernel: nest_mlp.2
$region0: #{nest_mlp.2}
  #allocation0 [shape = 'u32[]', space=smem, size = 0x4, offset = 0x4, fixed_abs, tag = 'smem constant byte address 0x4 - core index']
  #allocation1 [shape = 'u32[144,128]{1,0:T(1,128)}', space=vmem, size = 0x12000, scoped, tag = 'internal scratch']
  #allocation2 [shape = 'u32[2048]{0}', space=vmem, size = 0x2000, scoped, tag = 'scoped memory for nest_mlp.2']
  #allocation3 [shape = 'u32[2048]{0}', space=vmem, size = 0x2000, scoped, tag = 'scoped memory for nest_mlp.2']
  #allocation4 [shape = 'u32[2048]{0}', space=vmem, size = 0x2000, scoped, tag = 'scoped memory for nest_mlp.2']
  #allocation5 [shape = 'u32[2048]{0}', space=vmem, size = 0x2000, scoped, tag = 'scoped memory for nest_mlp.2']
  #allocation6 [shape = 'u32[2048]{0}', space=vmem, size = 0x2000, scoped, tag = 'scoped memory for nest_mlp.2']
  %s0 = inlined_call_operand.hbm [shape: bf16[3,128,128], index: 0, kind: input, shape index: {}]
  %s1 = inlined_call_operand.hbm [shape: f32[2,20], index: 1, kind: input, shape index: {}]
  %s2 = inlined_call_operand.<no memory space> [shape: f32[], index: 2, kind: input, shape index: {}]
  %s3 = inlined_call_operand.<no memory space> [shape: s32[], index: 3, kind: input, shape index: {}]
  %s4 = inlined_call_operand.<no memory space> [shape: f32[], index: 4, kind: input, shape index: {}]
  %s5 = inlined_call_operand.<no memory space> [shape: s32[], index: 5, kind: input, shape index: {}]
  %s6 = inlined_call_operand.vmem [shape: f32[8,128], index: 6, kind: output, shape index: {}]
  %s7 = sld [smem:[#allocation0]]
  $region26: #{nest_mlp.2} parent=0
    _
  %s9 = ssub.s32 1, %s7
  %s10 = scalar_select 0, %s9, %s7
  %v11 = vstv %s2
  %v12 = vstv %s3
  %v13 = vstv %s4
  %v14 = vstv %s5
  $region1: #{nest_mlp.2} parent=0
    #allocation7 [shape = 'u8[1024]{0}', space=vmem, size = 0x400, scoped, tag = 'operand span for operand 1']
    #allocation8 [shape = 's32[1]{0}', space=sflag, size = 0x4, scoped, tag = 'scoped memory for nest_mlp.2']
    #allocation9 [shape = 'u8[98304]{0}', space=vmem, size = 0x18000, scoped, tag = 'input window, operand 1, single buffered']
    #allocation10 [shape = 's32[1]{0}', space=sflag, size = 0x4, scoped, tag = 'scoped memory for nest_mlp.2']
    #allocation11 [shape = 'u8[4096]{0}', space=vmem, size = 0x1000, dematerialized = true, scoped, tag = 'FusionAdapter Buffer %fusion.1 = f32[8,128]{1,0:T(8,128)} fusion(%param_1.19, %param_2.13, %param_3.12, %param_4.13, %param_5.8), kind=kLoop, calls=%fused_computation.1.clone, metadata={op_name="jit(nest_mlp)/jit(_pad)/pad" stack_frame_id=8}']
    %15 = vsyncpa [#allocation8], 0
    %16 = vsyncpa [#allocation10], 0
    // Predicated region
    $region2: #{nest_mlp.2} parent=1 // pred_check
      _
    $region3: #{nest_mlp.2} parent=1 // pred_check_branch
      %18 = sbr.rel (0) target = $region5
    $region4: #{nest_mlp.2} parent=1 // pred_region
      %s20 = ssub.s32 32, 32
      %21 = vsyncadd [#allocation8], %s20
      %s23 = sshll.u32 [#allocation7], 4
      %s24 = int_to_ptr.vmem [resolvable:$true] %s23
      %26 = dma.hbm_to_vmem [thread:$0]  %s1, 32, %s24, [#allocation8]
    $region5: #{nest_mlp.2} parent=1 // pred_fallthru
      _
    // Predicated region
    $region6: #{nest_mlp.2} parent=1 // pred_check
      _
    $region7: #{nest_mlp.2} parent=1 // pred_check_branch
      %28 = sbr.rel (0) target = $region9
    $region8: #{nest_mlp.2} parent=1 // pred_region
      %s30 = ssub.s32 3072, 3072
      %31 = vsyncadd [#allocation10], %s30
      %s32 = sshll.u32 [#allocation9], 4
      %s33 = int_to_ptr.vmem [resolvable:$true] %s32
      %38 = dma.hbm_to_vmem [thread:$0]  %s0, 3072, %s33, [#allocation10], 64, 64, 4
    $region9: #{nest_mlp.2} parent=1 // pred_fallthru
      _
    // Predicated region
    $region10: #{nest_mlp.2} parent=1 // pred_check
      _
    $region11: #{nest_mlp.2} parent=1 // pred_check_branch
      %40 = sbr.rel (0) target = $region13
    $region12: #{nest_mlp.2} parent=1 // pred_region
      %41 = dma.done [#allocation8], 32
    $region13: #{nest_mlp.2} parent=1 // pred_fallthru
      _
    // Predicated region
    $region14: #{nest_mlp.2} parent=1 // pred_check
      _
    $region15: #{nest_mlp.2} parent=1 // pred_check_branch
      %43 = sbr.rel (0) target = $region17
    $region16: #{nest_mlp.2} parent=1 // pred_region
      %44 = dma.done [#allocation10], 3072
    $region17: #{nest_mlp.2} parent=1 // pred_fallthru
      _
    %v45 = vld [vmem:[#allocation7] sm:$0x3]
    %v46 = vlaneseq
    %v47 = vshrl.u32 %v46, 7
    %vm49 = vcmp.lt.s32.totalorder %v47, 2
    %v50 = vsel %vm49, %v45, %v11
    %v51 = vlaneseq
    %v52 = vand.u32 %v51, 127
    %vm54 = vcmp.lt.s32.totalorder %v52, 20
    %v55 = vsel %vm54, %v50, %v11
    %v56 = vlaneseq
    %v57 = vshrl.u32 %v56, 7
    %60 = xla_tuple %v57, %v14
    %61 = xla_tuple %60
    %vm62 = vcmp.lt.s32.totalorder %v57, %v14
    %v63 = vsel %vm62, 1, 0
    %64 = xla_tuple %v63
    %v65 = vlaneseq
    %v66 = vand.u32 %v65, 127
    %69 = xla_tuple %v66, %v12
    %70 = xla_tuple %69
    %vm71 = vcmp.lt.s32.totalorder %v66, %v12
    %v72 = vsel %vm71, 1, 0
    %73 = xla_tuple %v72
    %v74 = vand.u32 %v63, %v72
    %75 = xla_tuple %v63, %v55, %v13
    %76 = xla_tuple %75
    %v77 = vsel %vm62, %v55, %v13
    %78 = xla_tuple %v77
    %79 = xla_tuple %v74, %v77, %v13
    %80 = xla_tuple %79
    %vm81 = vcmp.ne.s32.totalorder %v74, 0
    %v82 = vsel %vm81, %v77, %v13
    %83 = xla_tuple %v82
    %85 = vst [vmem:[#allocation11] sm:$0xff] %v82
    %v87 = vld [vmem:[#allocation11] sm:$0xff]
    %v88 = vpack.c.bf16 %v87, %v87
    %v89 = vld [vmem:[#allocation9] sm:$0xf]
    %v90 = vld [vmem:[#allocation9 + $0x4] sm:$0xf]
    %v91 = vld [vmem:[#allocation9 + $0x8] sm:$0xf]
    %v92 = vld [vmem:[#allocation9 + $0xc] sm:$0xf]
    %v93 = vld [vmem:[#allocation9 + $0x10] sm:$0xf]
    %v94 = vld [vmem:[#allocation9 + $0x14] sm:$0xf]
    %v95 = vld [vmem:[#allocation9 + $0x18] sm:$0xf]
    %v96 = vld [vmem:[#allocation9 + $0x1c] sm:$0xf]
    %v97 = vld [vmem:[#allocation9 + $0x20] sm:$0xf]
    %v98 = vld [vmem:[#allocation9 + $0x24] sm:$0xf]
    %v99 = vld [vmem:[#allocation9 + $0x28] sm:$0xf]
    %v100 = vld [vmem:[#allocation9 + $0x2c] sm:$0xf]
    %v101 = vld [vmem:[#allocation9 + $0x30] sm:$0xf]
    %v102 = vld [vmem:[#allocation9 + $0x34] sm:$0xf]
    %v103 = vld [vmem:[#allocation9 + $0x38] sm:$0xf]
    %v104 = vld [vmem:[#allocation9 + $0x3c] sm:$0xf]
    %v121 = vunpack.c.l.b16 %v89
    %v122 = vunpack.c.l.b16 %v90
    %v123 = vunpack.c.l.b16 %v91
    %v124 = vunpack.c.l.b16 %v92
    %v125 = vunpack.c.l.b16 %v93
    %v126 = vunpack.c.l.b16 %v94
    %v127 = vunpack.c.l.b16 %v95
    %v128 = vunpack.c.l.b16 %v96
    %v129 = vunpack.c.l.b16 %v97
    %v130 = vunpack.c.l.b16 %v98
    %v131 = vunpack.c.l.b16 %v99
    %v132 = vunpack.c.l.b16 %v100
    %v133 = vunpack.c.l.b16 %v101
    %v134 = vunpack.c.l.b16 %v102
    %v135 = vunpack.c.l.b16 %v103
    %v136 = vunpack.c.l.b16 %v104
    %v137 = vpack.c.b16 %v122, %v121
    %v138 = vpack.c.b16 %v124, %v123
    %v139 = vpack.c.b16 %v126, %v125
    %v140 = vpack.c.b16 %v128, %v127
    %v141 = vpack.c.b16 %v130, %v129
    %v142 = vpack.c.b16 %v132, %v131
    %v143 = vpack.c.b16 %v134, %v133
    %v144 = vpack.c.b16 %v136, %v135
    %153 = vmatprep.subr.bf16.mxu0 0
    %154 = vmatpush1.bf16.msra.mxu0 %v137
    %155 = vmatprep.subr.bf16.mxu0 0
    %156 = vmatpush1.bf16.msra.mxu0 %v138
    %157 = vmatprep.subr.bf16.mxu0 0
    %158 = vmatpush1.bf16.msra.mxu0 %v139
    %159 = vmatprep.subr.bf16.mxu0 0
    %160 = vmatpush1.bf16.msra.mxu0 %v140
    %161 = vmatprep.subr.bf16.mxu0 0
    %162 = vmatpush1.bf16.msra.mxu0 %v141
    %163 = vmatprep.subr.bf16.mxu0 0
    %164 = vmatpush1.bf16.msra.mxu0 %v142
    %165 = vmatprep.subr.bf16.mxu0 0
    %166 = vmatpush1.bf16.msra.mxu0 %v143
    %167 = vmatprep.subr.bf16.mxu0 0
    %168 = vmatpush1.bf16.msra.mxu0 %v144
    %169 = vmatprep.subr.bf16.mxu0 0
    %170 = vmatpush1.bf16.msra.mxu0 0
    %171 = vmatprep.subr.bf16.mxu0 0
    %172 = vmatpush1.bf16.msra.mxu0 0
    %173 = vmatprep.subr.bf16.mxu0 0
    %174 = vmatpush1.bf16.msra.mxu0 0
    %175 = vmatprep.subr.bf16.mxu0 0
    %176 = vmatpush1.bf16.msra.mxu0 0
    %177 = vmatprep.subr.bf16.mxu0 0
    %178 = vmatpush1.bf16.msra.mxu0 0
    %179 = vmatprep.subr.bf16.mxu0 0
    %180 = vmatpush1.bf16.msra.mxu0 0
    %181 = vmatprep.subr.bf16.mxu0 0
    %182 = vmatpush1.bf16.msra.mxu0 0
    %183 = vmatprep.subr.bf16.mxu0 0
    %184 = vmatpush1.bf16.msra.mxu0 0
    %185 = vmatprep.mubr.bf16.mxu0 0
    %186 = vmatmul.mubr.bf16.gmra.mrb[0].mxu0 %v88
    %v187 = vpop.f32.mrb[0].mxu0
    %v188 = vadd.f32 0.0, %v187
    %v189 = vpop.f32.mrb[0].mxu0
    %v190 = vpop.f32.mrb[0].mxu0
    %v191 = vpop.f32.mrb[0].mxu0
    %192 = vdwg.mxu0
    %v193 = vmax.f32 %v188, 0.0
    %v194 = vpack.c.bf16 %v193, %v193
    %s195 = scalar_lea.vmem [#allocation9], 64
    %v196 = vld [vmem:[%s195] sm:$0xf]
    %v197 = vld [vmem:[%s195 + $0x4] sm:$0xf]
    %v198 = vld [vmem:[%s195 + $0x8] sm:$0xf]
    %v199 = vld [vmem:[%s195 + $0xc] sm:$0xf]
    %v200 = vld [vmem:[%s195 + $0x10] sm:$0xf]
    %v201 = vld [vmem:[%s195 + $0x14] sm:$0xf]
    %v202 = vld [vmem:[%s195 + $0x18] sm:$0xf]
    %v203 = vld [vmem:[%s195 + $0x1c] sm:$0xf]
    %v204 = vld [vmem:[%s195 + $0x20] sm:$0xf]
    %v205 = vld [vmem:[%s195 + $0x24] sm:$0xf]
    %v206 = vld [vmem:[%s195 + $0x28] sm:$0xf]
    %v207 = vld [vmem:[%s195 + $0x2c] sm:$0xf]
    %v208 = vld [vmem:[%s195 + $0x30] sm:$0xf]
    %v209 = vld [vmem:[%s195 + $0x34] sm:$0xf]
    %v210 = vld [vmem:[%s195 + $0x38] sm:$0xf]
    %v211 = vld [vmem:[%s195 + $0x3c] sm:$0xf]
    %v228 = vunpack.c.l.b16 %v196
    %v229 = vunpack.c.l.b16 %v197
    %v230 = vunpack.c.l.b16 %v198
    %v231 = vunpack.c.l.b16 %v199
    %v232 = vunpack.c.l.b16 %v200
    %v233 = vunpack.c.l.b16 %v201
    %v234 = vunpack.c.l.b16 %v202
    %v235 = vunpack.c.l.b16 %v203
    %v236 = vunpack.c.l.b16 %v204
    %v237 = vunpack.c.l.b16 %v205
    %v238 = vunpack.c.l.b16 %v206
    %v239 = vunpack.c.l.b16 %v207
    %v240 = vunpack.c.l.b16 %v208
    %v241 = vunpack.c.l.b16 %v209
    %v242 = vunpack.c.l.b16 %v210
    %v243 = vunpack.c.l.b16 %v211
    %v244 = vpack.c.b16 %v229, %v228
    %v245 = vpack.c.b16 %v231, %v230
    %v246 = vpack.c.b16 %v233, %v232
    %v247 = vpack.c.b16 %v235, %v234
    %v248 = vpack.c.b16 %v237, %v236
    %v249 = vpack.c.b16 %v239, %v238
    %v250 = vpack.c.b16 %v241, %v240
    %v251 = vpack.c.b16 %v243, %v242
    %260 = vmatprep.subr.bf16.mxu0 0
    %261 = vmatpush1.bf16.msra.mxu0 %v244
    %262 = vmatprep.subr.bf16.mxu0 0
    %263 = vmatpush1.bf16.msra.mxu0 %v245
    %264 = vmatprep.subr.bf16.mxu0 0
    %265 = vmatpush1.bf16.msra.mxu0 %v246
    %266 = vmatprep.subr.bf16.mxu0 0
    %267 = vmatpush1.bf16.msra.mxu0 %v247
    %268 = vmatprep.subr.bf16.mxu0 0
    %269 = vmatpush1.bf16.msra.mxu0 %v248
    %270 = vmatprep.subr.bf16.mxu0 0
    %271 = vmatpush1.bf16.msra.mxu0 %v249
    %272 = vmatprep.subr.bf16.mxu0 0
    %273 = vmatpush1.bf16.msra.mxu0 %v250
    %274 = vmatprep.subr.bf16.mxu0 0
    %275 = vmatpush1.bf16.msra.mxu0 %v251
    %276 = vmatprep.subr.bf16.mxu0 0
    %277 = vmatpush1.bf16.msra.mxu0 0
    %278 = vmatprep.subr.bf16.mxu0 0
    %279 = vmatpush1.bf16.msra.mxu0 0
    %280 = vmatprep.subr.bf16.mxu0 0
    %281 = vmatpush1.bf16.msra.mxu0 0
    %282 = vmatprep.subr.bf16.mxu0 0
    %283 = vmatpush1.bf16.msra.mxu0 0
    %284 = vmatprep.subr.bf16.mxu0 0
    %285 = vmatpush1.bf16.msra.mxu0 0
    %286 = vmatprep.subr.bf16.mxu0 0
    %287 = vmatpush1.bf16.msra.mxu0 0
    %288 = vmatprep.subr.bf16.mxu0 0
    %289 = vmatpush1.bf16.msra.mxu0 0
    %290 = vmatprep.subr.bf16.mxu0 0
    %291 = vmatpush1.bf16.msra.mxu0 0
    %292 = vmatprep.mubr.bf16.mxu0 0
    %293 = vmatmul.mubr.bf16.gmra.mrb[0].mxu0 %v194
    %v294 = vpop.f32.mrb[0].mxu0
    %v295 = vadd.f32 0.0, %v294
    %v296 = vpop.f32.mrb[0].mxu0
    %v297 = vpop.f32.mrb[0].mxu0
    %v298 = vpop.f32.mrb[0].mxu0
    %299 = vdwg.mxu0
    %v300 = vmax.f32 %v295, 0.0
    %v301 = vpack.c.bf16 %v300, %v300
    %s302 = scalar_lea.vmem [#allocation9], 128
    %v303 = vld [vmem:[%s302] sm:$0xf]
    %v304 = vld [vmem:[%s302 + $0x4] sm:$0xf]
    %v305 = vld [vmem:[%s302 + $0x8] sm:$0xf]
    %v306 = vld [vmem:[%s302 + $0xc] sm:$0xf]
    %v307 = vld [vmem:[%s302 + $0x10] sm:$0xf]
    %v308 = vld [vmem:[%s302 + $0x14] sm:$0xf]
    %v309 = vld [vmem:[%s302 + $0x18] sm:$0xf]
    %v310 = vld [vmem:[%s302 + $0x1c] sm:$0xf]
    %v311 = vld [vmem:[%s302 + $0x20] sm:$0xf]
    %v312 = vld [vmem:[%s302 + $0x24] sm:$0xf]
    %v313 = vld [vmem:[%s302 + $0x28] sm:$0xf]
    %v314 = vld [vmem:[%s302 + $0x2c] sm:$0xf]
    %v315 = vld [vmem:[%s302 + $0x30] sm:$0xf]
    %v316 = vld [vmem:[%s302 + $0x34] sm:$0xf]
    %v317 = vld [vmem:[%s302 + $0x38] sm:$0xf]
    %v318 = vld [vmem:[%s302 + $0x3c] sm:$0xf]
    %v335 = vunpack.c.l.b16 %v303
    %v336 = vunpack.c.l.b16 %v304
    %v337 = vunpack.c.l.b16 %v305
    %v338 = vunpack.c.l.b16 %v306
    %v339 = vunpack.c.l.b16 %v307
    %v340 = vunpack.c.l.b16 %v308
    %v341 = vunpack.c.l.b16 %v309
    %v342 = vunpack.c.l.b16 %v310
    %v343 = vunpack.c.l.b16 %v311
    %v344 = vunpack.c.l.b16 %v312
    %v345 = vunpack.c.l.b16 %v313
    %v346 = vunpack.c.l.b16 %v314
    %v347 = vunpack.c.l.b16 %v315
    %v348 = vunpack.c.l.b16 %v316
    %v349 = vunpack.c.l.b16 %v317
    %v350 = vunpack.c.l.b16 %v318
    %v351 = vpack.c.b16 %v336, %v335
    %v352 = vpack.c.b16 %v338, %v337
    %v353 = vpack.c.b16 %v340, %v339
    %v354 = vpack.c.b16 %v342, %v341
    %v355 = vpack.c.b16 %v344, %v343
    %v356 = vpack.c.b16 %v346, %v345
    %v357 = vpack.c.b16 %v348, %v347
    %v358 = vpack.c.b16 %v350, %v349
    %367 = vmatprep.subr.bf16.mxu0 0
    %368 = vmatpush1.bf16.msra.mxu0 %v351
    %369 = vmatprep.subr.bf16.mxu0 0
    %370 = vmatpush1.bf16.msra.mxu0 %v352
    %371 = vmatprep.subr.bf16.mxu0 0
    %372 = vmatpush1.bf16.msra.mxu0 %v353
    %373 = vmatprep.subr.bf16.mxu0 0
    %374 = vmatpush1.bf16.msra.mxu0 %v354
    %375 = vmatprep.subr.bf16.mxu0 0
    %376 = vmatpush1.bf16.msra.mxu0 %v355
    %377 = vmatprep.subr.bf16.mxu0 0
    %378 = vmatpush1.bf16.msra.mxu0 %v356
    %379 = vmatprep.subr.bf16.mxu0 0
    %380 = vmatpush1.bf16.msra.mxu0 %v357
    %381 = vmatprep.subr.bf16.mxu0 0
    %382 = vmatpush1.bf16.msra.mxu0 %v358
    %383 = vmatprep.subr.bf16.mxu0 0
    %384 = vmatpush1.bf16.msra.mxu0 0
    %385 = vmatprep.subr.bf16.mxu0 0
    %386 = vmatpush1.bf16.msra.mxu0 0
    %387 = vmatprep.subr.bf16.mxu0 0
    %388 = vmatpush1.bf16.msra.mxu0 0
    %389 = vmatprep.subr.bf16.mxu0 0
    %390 = vmatpush1.bf16.msra.mxu0 0
    %391 = vmatprep.subr.bf16.mxu0 0
    %392 = vmatpush1.bf16.msra.mxu0 0
    %393 = vmatprep.subr.bf16.mxu0 0
    %394 = vmatpush1.bf16.msra.mxu0 0
    %395 = vmatprep.subr.bf16.mxu0 0
    %396 = vmatpush1.bf16.msra.mxu0 0
    %397 = vmatprep.subr.bf16.mxu0 0
    %398 = vmatpush1.bf16.msra.mxu0 0
    %399 = vmatprep.mubr.bf16.mxu0 0
    %400 = vmatmul.mubr.bf16.gmra.mrb[0].mxu0 %v301
    %v401 = vpop.f32.mrb[0].mxu0
    %v402 = vadd.f32 0.0, %v401
    %v403 = vpop.f32.mrb[0].mxu0
    %v404 = vpop.f32.mrb[0].mxu0
    %v405 = vpop.f32.mrb[0].mxu0
    %406 = vdwg.mxu0
    %407 = vst [vmem:[%s6] sm:$0xff] %v402
    // Predicated region
    $region18: #{nest_mlp.2} parent=1 // pred_check
      _
    $region19: #{nest_mlp.2} parent=1 // pred_check_branch
      %409 = sbr.rel (0) target = $region21
    $region20: #{nest_mlp.2} parent=1 // pred_region
      _
    $region21: #{nest_mlp.2} parent=1 // pred_fallthru
      _
    // Predicated region
    $region22: #{nest_mlp.2} parent=1 // pred_check
      _
    $region23: #{nest_mlp.2} parent=1 // pred_check_branch
      %411 = sbr.rel (0) target = $region25
    $region24: #{nest_mlp.2} parent=1 // pred_region
      _
    $region25: #{nest_mlp.2} parent=1 // pred_fallthru
      _
    %412 = vsyncpa [#allocation8], 1
    %413 = vsyncpa [#allocation10], 1

</llo_original>
